<compile_context>
chip_gen: v7x
topology: tpu7x:2x2x1
jax: 0.10.0
libtpu: 0.0.40
codegen_flags: <defaults>
</compile_context>

<pallas_src>
import functools

import jax
import jax.numpy as jnp
from jax.experimental import pallas as pl
from jax.experimental.pallas import tpu as pltpu


def _round_up(x, m):
    return (x + m - 1) // m * m


def _pick_tn(dp, tn_req):
    """Largest multiple of 128 that divides dp and is <= tn_req."""
    tn_req = max(128, min(tn_req, dp))
    best = 128
    t = 128
    while t <= tn_req:
        if dp % t == 0:
            best = t
        t += 128
    return best


def residual_kernel(x_ref, scale_ref, bias_ref, w_ref, b_ref, o_ref,
                    *, d_actual, tn):
    # x_ref:     (TM, Dp)  row tile, full (padded) embed dim
    # scale/bias:(1, Dp)   norm params (f32, padded with zeros)
    # w_ref:     (Dp, TN)  linear weight column tile (native dtype)
    # b_ref:     (1, TN)   linear bias column tile (f32)
    # o_ref:     (TM, TN)  output tile
    j = pl.program_id(1)

    x = x_ref[...].astype(jnp.float32)          # (TM, Dp)
    dp = x.shape[-1]

    # --- Normalization (torch.mean / torch.std, unbiased; eps on std) ---
    # Padded columns of x are zero, so the sum over Dp equals the sum over D.
    mean = jnp.sum(x, axis=-1, keepdims=True) * (1.0 / d_actual)
    centered = x - mean
    if dp != d_actual:
        # Mask the padded lanes so they do not pollute the variance.
        col = jax.lax.broadcasted_iota(jnp.int32, (1, dp), 1)
        centered = jnp.where(col < d_actual, centered, 0.0)
    var = jnp.sum(centered * centered, axis=-1, keepdims=True) * (
        1.0 / (d_actual - 1))
    std = jnp.sqrt(var)
    inv = pl.reciprocal(std + 1e-6, approx=False)        # (TM, 1), exact
    normed = scale_ref[...] * centered * inv + bias_ref[...]

    # --- Sublayer `model`: Linear(embed_dim -> embed_dim) on the MXU ---
    # Operands in the weight's native dtype (bf16 ready), f32 accumulation.
    hidden = jnp.dot(normed.astype(w_ref.dtype), w_ref[...],
                     preferred_element_type=jnp.float32)
    hidden = hidden + b_ref[...]

    # Dropout: eval-mode identity (p=0.1 only active in training).
    # TODO(synk): training-mode dropout via pltpu.prng_seed / prng_random_bits.

    # --- Residual add (only this tile's output columns) ---
    col0 = pl.multiple_of(j * tn, tn)
    x_cols = x_ref[:, pl.ds(col0, tn)].astype(jnp.float32)
    o_ref[...] = (x_cols + hidden).astype(o_ref.dtype)


def residual_connection(x, scale, bias, w, b, *, tm=512, tn=512):
    B, S, D = x.shape
    rows = B * S
    out_dtype = x.dtype

    # Lane-dense embed dim (multiple of 128) and row padding for large tiles.
    dp = _round_up(D, 128)
    tm = max(8, min(tm, _round_up(rows, 8)))
    rows_p = _round_up(rows, tm)
    tn = _pick_tn(dp, tn)

    x2 = jnp.pad(x.reshape(rows, D), ((0, rows_p - rows), (0, dp - D)))
    scale_p = jnp.pad(scale.astype(jnp.float32).reshape(1, D),
                      ((0, 0), (0, dp - D)))
    bias_p = jnp.pad(bias.astype(jnp.float32).reshape(1, D),
                     ((0, 0), (0, dp - D)))
    w_p = jnp.pad(w, ((0, dp - D), (0, dp - D)))            # native dtype
    b_p = jnp.pad(b.astype(jnp.float32).reshape(1, D), ((0, 0), (0, dp - D)))

    kernel = functools.partial(residual_kernel, d_actual=D, tn=tn)

    out = pl.pallas_call(
        kernel,
        out_shape=jax.ShapeDtypeStruct((rows_p, dp), out_dtype),
        grid_spec=pltpu.PrefetchScalarGridSpec(
            num_scalar_prefetch=0,
            grid=(rows_p // tm, dp // tn),
            in_specs=[
                pl.BlockSpec((tm, dp), lambda i, j: (i, 0)),   # x row tile
                pl.BlockSpec((1, dp), lambda i, j: (0, 0)),    # norm scale
                pl.BlockSpec((1, dp), lambda i, j: (0, 0)),    # norm bias
                pl.BlockSpec((dp, tn), lambda i, j: (0, j)),   # W column tile
                pl.BlockSpec((1, tn), lambda i, j: (0, j)),    # linear bias
            ],
            out_specs=pl.BlockSpec((tm, tn), lambda i, j: (i, j)),
        ),
        compiler_params=pltpu.CompilerParams(
            dimension_semantics=("parallel", "parallel"),
            vmem_limit_bytes=48 * 1024 * 1024,
        ),
    )(x2, scale_p, bias_p, w_p, b_p)

    return out[:rows, :D].reshape(B, S, D)


def reference(x, scale, bias, w, b):
    xf = x.astype(jnp.float32)
    mean = jnp.mean(xf, axis=-1, keepdims=True)
    centered = xf - mean
    var = jnp.sum(centered * centered, axis=-1, keepdims=True) / (
        xf.shape[-1] - 1)
    std = jnp.sqrt(var)
    normed = scale * centered / (std + 1e-6) + bias
    hidden = normed @ w.astype(jnp.float32) + b
    return xf + hidden


if __name__ == "__main__":
    B, S, D = 2, 8, 32
    key = jax.random.PRNGKey(0)
    kx, kw = jax.random.split(key)

    x = jax.random.normal(kx, (B, S, D), dtype=jnp.float32)

    # Normalization parameters (module __init__: ones / zeros of shape embed_dim)
    scale = jnp.ones((D,), dtype=jnp.float32)
    bias = jnp.zeros((D,), dtype=jnp.float32)

    # Deterministic synthetic sublayer `model` = Linear(D, D)
    w = jax.random.normal(kw, (D, D), dtype=jnp.float32) * 0.02
    b = jnp.zeros((D,), dtype=jnp.float32)

    out = residual_connection(x, scale, bias, w, b)
    out = jax.block_until_ready(out)

    ref = reference(x, scale, bias, w, b)
    assert out.shape == (B, S, D)
    assert jnp.allclose(out, ref, rtol=1e-4, atol=1e-4)
    print("KERNEL_OK")
</pallas_src>

<mosaic_0001>
module attributes {stable_mosaic.version = 11 : i64} {
  func.func @residual_kernel(%arg0: i32, %arg1: i32, %arg2: memref<16x128xf32, #tpu.memory_space<vmem>>, %arg3: memref<1x128xf32, #tpu.memory_space<vmem>>, %arg4: memref<1x128xf32, #tpu.memory_space<vmem>>, %arg5: memref<128x128xf32, #tpu.memory_space<vmem>>, %arg6: memref<1x128xf32, #tpu.memory_space<vmem>>, %arg7: memref<16x128xf32, #tpu.memory_space<vmem>>) attributes {dimension_semantics = [#tpu.dimension_semantics<parallel>, #tpu.dimension_semantics<parallel>], iteration_bounds = array<i64: 1, 1>, scalar_prefetch = 0 : i64, scratch_operands = 0 : i64, tpu.core_type = #tpu.core_type<tc>, window_params = [{transform_indices = @transform_0, window_bounds = array<i64: 16, 128>}, {pipeline_mode = #tpu.pipeline_mode<synchronous>, transform_indices = @transform_1, window_bounds = array<i64: 1, 128>}, {pipeline_mode = #tpu.pipeline_mode<synchronous>, transform_indices = @transform_2, window_bounds = array<i64: 1, 128>}, {transform_indices = @transform_3, window_bounds = array<i64: 128, 128>}, {transform_indices = @transform_4, window_bounds = array<i64: 1, 128>}, {transform_indices = @transform_5, window_bounds = array<i64: 16, 128>}]} {
    %c0 = arith.constant 0 : index
    %c0_0 = arith.constant 0 : index
    %0 = vector.load %arg2[%c0, %c0_0] : memref<16x128xf32, #tpu.memory_space<vmem>>, vector<16x128xf32>
    %cst = arith.constant dense<0.000000e+00> : vector<16xf32>
    %1 = vector.multi_reduction <add>, %0, %cst [1] : vector<16x128xf32> to vector<16xf32>
    %2 = vector.shape_cast %1 : vector<16xf32> to vector<16x1xf32>
    %cst_1 = arith.constant 3.125000e-02 : f32
    %3 = vector.broadcast %cst_1 : f32 to vector<16x1xf32>
    %4 = arith.mulf %2, %3 : vector<16x1xf32>
    %5 = vector.broadcast %4 : vector<16x1xf32> to vector<16x128xf32>
    %6 = arith.subf %0, %5 : vector<16x128xf32>
    %7 = tpu.iota {dimensions = array<i32: 1>} : vector<1x128xi32>
    %c32_i32 = arith.constant 32 : i32
    %8 = vector.broadcast %c32_i32 : i32 to vector<1x128xi32>
    %9 = arith.cmpi slt, %7, %8 : vector<1x128xi32>
    %cst_2 = arith.constant 0.000000e+00 : f32
    %10 = vector.shape_cast %9 : vector<1x128xi1> to vector<1x128xi1>
    %11 = vector.broadcast %10 : vector<1x128xi1> to vector<16x128xi1>
    %12 = vector.broadcast %cst_2 : f32 to vector<16x128xf32>
    %13 = arith.select %11, %6, %12 : vector<16x128xi1>, vector<16x128xf32>
    %14 = arith.mulf %13, %13 : vector<16x128xf32>
    %cst_3 = arith.constant dense<0.000000e+00> : vector<16xf32>
    %15 = vector.multi_reduction <add>, %14, %cst_3 [1] : vector<16x128xf32> to vector<16xf32>
    %16 = vector.shape_cast %15 : vector<16xf32> to vector<16x1xf32>
    %cst_4 = arith.constant 0.0322580636 : f32
    %17 = vector.broadcast %cst_4 : f32 to vector<16x1xf32>
    %18 = arith.mulf %16, %17 : vector<16x1xf32>
    %19 = math.sqrt %18 : vector<16x1xf32>
    %cst_5 = arith.constant 9.99999997E-7 : f32
    %20 = vector.broadcast %cst_5 : f32 to vector<16x1xf32>
    %21 = arith.addf %19, %20 : vector<16x1xf32>
    %22 = tpu.reciprocal %21 : vector<16x1xf32> -> vector<16x1xf32>
    %c0_6 = arith.constant 0 : index
    %c0_7 = arith.constant 0 : index
    %23 = vector.load %arg3[%c0_6, %c0_7] : memref<1x128xf32, #tpu.memory_space<vmem>>, vector<1x128xf32>
    %24 = vector.broadcast %23 : vector<1x128xf32> to vector<16x128xf32>
    %25 = arith.mulf %24, %13 : vector<16x128xf32>
    %26 = vector.broadcast %22 : vector<16x1xf32> to vector<16x128xf32>
    %27 = arith.mulf %25, %26 : vector<16x128xf32>
    %c0_8 = arith.constant 0 : index
    %c0_9 = arith.constant 0 : index
    %28 = vector.load %arg4[%c0_8, %c0_9] : memref<1x128xf32, #tpu.memory_space<vmem>>, vector<1x128xf32>
    %29 = vector.broadcast %28 : vector<1x128xf32> to vector<16x128xf32>
    %30 = arith.addf %27, %29 : vector<16x128xf32>
    %c0_10 = arith.constant 0 : index
    %c0_11 = arith.constant 0 : index
    %31 = vector.load %arg5[%c0_10, %c0_11] : memref<128x128xf32, #tpu.memory_space<vmem>>, vector<128x128xf32>
    %cst_12 = arith.constant dense<0.000000e+00> : vector<16x128xf32>
    %32 = tpu.matmul %30, %31, %cst_12 {dimension_numbers = #tpu.dot_dimension_numbers<[1], [0], [0], [1], [0, 0, 1, 1], [], []>} : vector<16x128xf32>, vector<128x128xf32>, vector<16x128xf32> -> vector<16x128xf32>
    %c0_13 = arith.constant 0 : index
    %c0_14 = arith.constant 0 : index
    %33 = vector.load %arg6[%c0_13, %c0_14] : memref<1x128xf32, #tpu.memory_space<vmem>>, vector<1x128xf32>
    %34 = vector.broadcast %33 : vector<1x128xf32> to vector<16x128xf32>
    %35 = arith.addf %32, %34 : vector<16x128xf32>
    %c128_i32 = arith.constant 128 : i32
    %36 = arith.muli %arg1, %c128_i32 : i32
    %37 = tpu.assume_multiple %36, 128 : i32
    %c0_15 = arith.constant 0 : index
    %38 = arith.index_cast %37 : i32 to index
    %39 = vector.load %arg2[%c0_15, %38] : memref<16x128xf32, #tpu.memory_space<vmem>>, vector<16x128xf32>
    %40 = arith.addf %39, %35 : vector<16x128xf32>
    %c0_16 = arith.constant 0 : index
    %c0_17 = arith.constant 0 : index
    %41 = vector.load %arg7[%c0_16, %c0_17] : memref<16x128xf32, #tpu.memory_space<vmem>>, vector<16x128xf32>
    tpu.vector_store %arg7[%c0_16, %c0_17], %40 {strides = array<i32>} : memref<16x128xf32, #tpu.memory_space<vmem>>, vector<16x128xf32>,
    return
  }
  func.func @transform_0(%arg0: i32, %arg1: i32) -> (i32, i32) {
    %c0_i32 = arith.constant 0 : i32
    %c0_i32_0 = arith.constant 0 : i32
    return %arg0, %c0_i32 : i32, i32
  }
  func.func @transform_1(%arg0: i32, %arg1: i32) -> (i32, i32) {
    %c0_i32 = arith.constant 0 : i32
    %c0_i32_0 = arith.constant 0 : i32
    %c0_i32_1 = arith.constant 0 : i32
    return %c0_i32, %c0_i32_0 : i32, i32
  }
  func.func @transform_2(%arg0: i32, %arg1: i32) -> (i32, i32) {
    %c0_i32 = arith.constant 0 : i32
    %c0_i32_0 = arith.constant 0 : i32
    %c0_i32_1 = arith.constant 0 : i32
    return %c0_i32, %c0_i32_0 : i32, i32
  }
  func.func @transform_3(%arg0: i32, %arg1: i32) -> (i32, i32) {
    %c0_i32 = arith.constant 0 : i32
    %c0_i32_0 = arith.constant 0 : i32
    return %c0_i32, %arg1 : i32, i32
  }
  func.func @transform_4(%arg0: i32, %arg1: i32) -> (i32, i32) {
    %c0_i32 = arith.constant 0 : i32
    %c0_i32_0 = arith.constant 0 : i32
    return %c0_i32, %arg1 : i32, i32
  }
  func.func @transform_5(%arg0: i32, %arg1: i32) -> (i32, i32) {
    %c0_i32 = arith.constant 0 : i32
    return %arg0, %arg1 : i32, i32
  }
}

</mosaic_0001>

<llo_original>
// kernel: tpu_custom_call.1
$region0: #{tpu_custom_call.1}
  #allocation0 [shape = 'u32[]', space=smem, size = 0x4, offset = 0x4, fixed_abs, tag = 'smem constant byte address 0x4 - core index']
  #allocation1 [shape = 'u32[144,128]{1,0:T(1,128)}', space=vmem, size = 0x12000, scoped, tag = 'internal scratch']
  %s0 = inlined_call_operand.hbm [shape: f32[16,128], index: 0, kind: input, shape index: {}]
  %s1 = inlined_call_operand.vmem [shape: f32[1,128], index: 1, kind: input, shape index: {}]
  %s2 = inlined_call_operand.vmem [shape: f32[1,128], index: 2, kind: input, shape index: {}]
  %s3 = inlined_call_operand.hbm [shape: f32[128,128], index: 3, kind: input, shape index: {}]
  %s4 = inlined_call_operand.vmem [shape: f32[1,128], index: 4, kind: input, shape index: {}]
  %s5 = inlined_call_operand.hbm [shape: f32[16,128], index: 5, kind: output, shape index: {}]
  %s6 = sld [smem:[#allocation0]]
  $region38: #{tpu_custom_call.1} parent=0
    _
  %s8 = ssub.s32 1, %s6
  %s9 = scalar_select 0, %s8, %s6
  $region1: #{tpu_custom_call.1} parent=0
    #allocation2 [shape = 'u8[8192]{0}', space=vmem, size = 0x2000, scoped, tag = 'input window, operand 0, single buffered']
    #allocation3 [shape = 's32[1]{0}', space=sflag, size = 0x4, scoped, tag = 'scoped memory for tpu_custom_call.1']
    #allocation4 [shape = 's32[1]{0}', space=sflag, size = 0x4, scoped, tag = 'scoped memory for tpu_custom_call.1']
    #allocation5 [shape = 'u8[65536]{0}', space=vmem, size = 0x10000, scoped, tag = 'input window, operand 3, single buffered']
    #allocation6 [shape = 's32[1]{0}', space=sflag, size = 0x4, scoped, tag = 'scoped memory for tpu_custom_call.1']
    #allocation7 [shape = 'u8[8192]{0}', space=vmem, size = 0x2000, scoped, tag = 'output window, operand 0, single buffered']
    %10 = vsyncpa [#allocation3], 0
    %11 = vsyncpa [#allocation6], 0
    %12 = vsyncpa [#allocation4], 0
    // Predicated region
    $region2: #{tpu_custom_call.1} parent=1 // pred_check
      _
    $region3: #{tpu_custom_call.1} parent=1 // pred_check_branch
      %14 = sbr.rel (0) target = $region5
    $region4: #{tpu_custom_call.1} parent=1 // pred_region
      %s16 = ssub.s32 256, 256
      %17 = vsyncadd [#allocation3], %s16
      %s18 = sshll.u32 [#allocation2], 4
      %s19 = int_to_ptr.vmem [resolvable:$true] %s18
      %24 = dma.hbm_to_vmem [thread:$0]  %s0, 256, %s19, [#allocation3], 128, 128, 8
    $region5: #{tpu_custom_call.1} parent=1 // pred_fallthru
      _
    // Predicated region
    $region6: #{tpu_custom_call.1} parent=1 // pred_check
      _
    $region7: #{tpu_custom_call.1} parent=1 // pred_check_branch
      %26 = sbr.rel (0) target = $region9
    $region8: #{tpu_custom_call.1} parent=1 // pred_region
      _
    $region9: #{tpu_custom_call.1} parent=1 // pred_fallthru
      _
    // Predicated region
    $region10: #{tpu_custom_call.1} parent=1 // pred_check
      _
    $region11: #{tpu_custom_call.1} parent=1 // pred_check_branch
      %28 = sbr.rel (0) target = $region13
    $region12: #{tpu_custom_call.1} parent=1 // pred_region
      _
    $region13: #{tpu_custom_call.1} parent=1 // pred_fallthru
      _
    // Predicated region
    $region14: #{tpu_custom_call.1} parent=1 // pred_check
      _
    $region15: #{tpu_custom_call.1} parent=1 // pred_check_branch
      %30 = sbr.rel (0) target = $region17
    $region16: #{tpu_custom_call.1} parent=1 // pred_region
      %s32 = ssub.s32 2048, 2048
      %33 = vsyncadd [#allocation6], %s32
      %s34 = sshll.u32 [#allocation5], 4
      %s35 = int_to_ptr.vmem [resolvable:$true] %s34
      %40 = dma.hbm_to_vmem [thread:$0]  %s3, 2048, %s35, [#allocation6], 128, 128, 8
    $region17: #{tpu_custom_call.1} parent=1 // pred_fallthru
      _
    // Predicated region
    $region18: #{tpu_custom_call.1} parent=1 // pred_check
      _
    $region19: #{tpu_custom_call.1} parent=1 // pred_check_branch
      %42 = sbr.rel (0) target = $region21
    $region20: #{tpu_custom_call.1} parent=1 // pred_region
      _
    $region21: #{tpu_custom_call.1} parent=1 // pred_fallthru
      _
    // Predicated region
    $region22: #{tpu_custom_call.1} parent=1 // pred_check
      _
    $region23: #{tpu_custom_call.1} parent=1 // pred_check_branch
      %44 = sbr.rel (0) target = $region25
    $region24: #{tpu_custom_call.1} parent=1 // pred_region
      %45 = dma.done [#allocation3], 256
    $region25: #{tpu_custom_call.1} parent=1 // pred_fallthru
      _
    // Predicated region
    $region26: #{tpu_custom_call.1} parent=1 // pred_check
      _
    $region27: #{tpu_custom_call.1} parent=1 // pred_check_branch
      %47 = sbr.rel (0) target = $region29
    $region28: #{tpu_custom_call.1} parent=1 // pred_region
      %48 = dma.done [#allocation6], 2048
    $region29: #{tpu_custom_call.1} parent=1 // pred_fallthru
      _
    %v49 = vld [vmem:[#allocation2] sm:$0xff]
    %v50 = vld [vmem:[#allocation2 + $0x8] sm:$0xff]
    %51 = vadd.xlane.f32.xlu0 %v49
    %v52 = vpop.xlane.xlu0 %51
    %53 = vadd.xlane.f32.xlu0 %v50
    %v54 = vpop.xlane.xlu0 %53
    %v55 = vmul.f32 %v52, 0.03125
    %v56 = vmul.f32 %v54, 0.03125
    %v57 = vsub.f32 %v49, %v55
    %v58 = vsub.f32 %v50, %v56
    %v59 = vlaneseq
    %v60 = vand.u32 %v59, 127
    %vm61 = vcmp.lt.s32.totalorder %v60, 32
    %v62 = vsel %vm61, 1, 0
    %vm63 = vcmp.eq.s32.totalorder %v62, 1
    %v64 = vsel %vm63, %v57, 0.0
    %v65 = vsel %vm63, %v58, 0.0
    %v66 = vmul.f32 %v64, %v64
    %v67 = vmul.f32 %v65, %v65
    %68 = vadd.xlane.f32.xlu0 %v66
    %v69 = vpop.xlane.xlu0 %68
    %70 = vadd.xlane.f32.xlu0 %v67
    %v71 = vpop.xlane.xlu0 %70
    %v72 = vmul.f32 %v69, 0.032258064
    %v73 = vmul.f32 %v71, 0.032258064
    %v74 = vrsqrt.pop %v72
    %v75 = vmul.f32 %v72, %v74
    %vm76 = vcmp.eq.f32.partialorder %v72, inf
    %v77 = vsel %vm76, %v72, %v75
    %vm78 = vcmp.eq.f32.partialorder %v72, 0.0
    %v79 = vand.u32 %v72, 2147483648
    %v80 = vsel %vm78, %v79, %v77
    %v81 = vrsqrt.pop %v73
    %v82 = vmul.f32 %v73, %v81
    %vm83 = vcmp.eq.f32.partialorder %v73, inf
    %v84 = vsel %vm83, %v73, %v82
    %vm85 = vcmp.eq.f32.partialorder %v73, 0.0
    %v86 = vand.u32 %v73, 2147483648
    %v87 = vsel %vm85, %v86, %v84
    %v88 = vadd.f32 %v80, 1e-06
    %v89 = vadd.f32 %v87, 1e-06
    %v90 = vrcp.pop %v88
    %v91 = vrcp.pop %v89
    %v92 = vld [vmem:[%s1] sm:$0x1]
    %v94 = vlaneseq
    %v95 = vshrl.u32 %v94, 7
    %v96 = vsub.s32 0, %v95
    %v97 = vrot.slane %v92, %v96
    %v99 = vmul.f32 %v97, %v64
    %v100 = vmul.f32 %v97, %v65
    %v101 = vmul.f32 %v99, %v90
    %v102 = vmul.f32 %v100, %v91
    %v103 = vld [vmem:[%s2] sm:$0x1]
    %v105 = vlaneseq
    %v106 = vshrl.u32 %v105, 7
    %v107 = vsub.s32 0, %v106
    %v108 = vrot.slane %v103, %v107
    %v110 = vadd.f32 %v101, %v108
    %v111 = vadd.f32 %v102, %v108
    %v112 = vld [vmem:[#allocation5] sm:$0xff]
    %v113 = vld [vmem:[#allocation5 + $0x8] sm:$0xff]
    %v114 = vld [vmem:[#allocation5 + $0x10] sm:$0xff]
    %v115 = vld [vmem:[#allocation5 + $0x18] sm:$0xff]
    %v116 = vld [vmem:[#allocation5 + $0x20] sm:$0xff]
    %v117 = vld [vmem:[#allocation5 + $0x28] sm:$0xff]
    %v118 = vld [vmem:[#allocation5 + $0x30] sm:$0xff]
    %v119 = vld [vmem:[#allocation5 + $0x38] sm:$0xff]
    %v120 = vld [vmem:[#allocation5 + $0x40] sm:$0xff]
    %v121 = vld [vmem:[#allocation5 + $0x48] sm:$0xff]
    %v122 = vld [vmem:[#allocation5 + $0x50] sm:$0xff]
    %v123 = vld [vmem:[#allocation5 + $0x58] sm:$0xff]
    %v124 = vld [vmem:[#allocation5 + $0x60] sm:$0xff]
    %v125 = vld [vmem:[#allocation5 + $0x68] sm:$0xff]
    %v126 = vld [vmem:[#allocation5 + $0x70] sm:$0xff]
    %v127 = vld [vmem:[#allocation5 + $0x78] sm:$0xff]
    %v128 = vld [vmem:[%s4] sm:$0x1]
    %v130 = vlaneseq
    %v131 = vshrl.u32 %v130, 7
    %v132 = vsub.s32 0, %v131
    %v133 = vrot.slane %v128, %v132
    %135 = vmatprep.subr.mxu0 0.0
    %136 = vmatpush1.msra.mxu0 %v112
    %137 = vmatprep.subr.mxu0 0.0
    %138 = vmatpush1.msra.mxu0 %v113
    %139 = vmatprep.subr.mxu0 0.0
    %140 = vmatpush1.msra.mxu0 %v114
    %141 = vmatprep.subr.mxu0 0.0
    %142 = vmatpush1.msra.mxu0 %v115
    %143 = vmatprep.subr.mxu0 0.0
    %144 = vmatpush1.msra.mxu0 %v116
    %145 = vmatprep.subr.mxu0 0.0
    %146 = vmatpush1.msra.mxu0 %v117
    %147 = vmatprep.subr.mxu0 0.0
    %148 = vmatpush1.msra.mxu0 %v118
    %149 = vmatprep.subr.mxu0 0.0
    %150 = vmatpush1.msra.mxu0 %v119
    %151 = vmatprep.subr.mxu0 0.0
    %152 = vmatpush1.msra.mxu0 %v120
    %153 = vmatprep.subr.mxu0 0.0
    %154 = vmatpush1.msra.mxu0 %v121
    %155 = vmatprep.subr.mxu0 0.0
    %156 = vmatpush1.msra.mxu0 %v122
    %157 = vmatprep.subr.mxu0 0.0
    %158 = vmatpush1.msra.mxu0 %v123
    %159 = vmatprep.subr.mxu0 0.0
    %160 = vmatpush1.msra.mxu0 %v124
    %161 = vmatprep.subr.mxu0 0.0
    %162 = vmatpush1.msra.mxu0 %v125
    %163 = vmatprep.subr.mxu0 0.0
    %164 = vmatpush1.msra.mxu0 %v126
    %165 = vmatprep.subr.mxu0 0.0
    %166 = vmatpush1.msra.mxu0 %v127
    %167 = vmatprep.subr.mxu0 0.0
    %168 = vmatpush1.msra.mxu0 0.0
    %169 = vmatprep.subr.mxu0 0.0
    %170 = vmatpush1.msra.mxu0 0.0
    %171 = vmatprep.subr.mxu0 0.0
    %172 = vmatpush1.msra.mxu0 0.0
    %173 = vmatprep.subr.mxu0 0.0
    %174 = vmatpush1.msra.mxu0 0.0
    %175 = vmatprep.subr.mxu0 0.0
    %176 = vmatpush1.msra.mxu0 0.0
    %177 = vmatprep.subr.mxu0 0.0
    %178 = vmatpush1.msra.mxu0 0.0
    %179 = vmatprep.subr.mxu0 0.0
    %180 = vmatpush1.msra.mxu0 0.0
    %181 = vmatprep.subr.mxu0 0.0
    %182 = vmatpush1.msra.mxu0 0.0
    %183 = vmatprep.subr.mxu0 0.0
    %184 = vmatpush1.msra.mxu0 0.0
    %185 = vmatprep.subr.mxu0 0.0
    %186 = vmatpush1.msra.mxu0 0.0
    %187 = vmatprep.subr.mxu0 0.0
    %188 = vmatpush1.msra.mxu0 0.0
    %189 = vmatprep.subr.mxu0 0.0
    %190 = vmatpush1.msra.mxu0 0.0
    %191 = vmatprep.subr.mxu0 0.0
    %192 = vmatpush1.msra.mxu0 0.0
    %193 = vmatprep.subr.mxu0 0.0
    %194 = vmatpush1.msra.mxu0 0.0
    %195 = vmatprep.subr.mxu0 0.0
    %196 = vmatpush1.msra.mxu0 0.0
    %197 = vmatprep.subr.mxu0 0.0
    %198 = vmatpush1.msra.mxu0 0.0
    %199 = vmatprep.mubr.f32.mxu0 0.0
    %200 = vmatmul.mubr.f32.gmra.mrb[0].mxu0 %v110
    %v201 = vpop.f32.mrb[0].mxu0
    %v202 = vadd.f32 %v133, %v201
    %v203 = vpop.f32.mrb[0].mxu0
    %204 = vmatprep.mubr.f32.mxu0 0.0
    %205 = vmatmul.mubr.f32.gmra.mrb[0].mxu0 %v111
    %v206 = vpop.f32.mrb[0].mxu0
    %v207 = vadd.f32 %v133, %v206
    %v208 = vpop.f32.mrb[0].mxu0
    %209 = vdwg.mxu0
    %s210 = smul.u32 0, 128
    %s211 = sshra.s32 %s210, 7
    %s212 = sand.u32 %s210, 127
    %s213 = scalar_lea.vmem [#allocation2], %s211
    %v214 = vld [vmem:[%s213] sm:$0xff]
    %v215 = vld [vmem:[%s213 + $0x8] sm:$0xff]
    %v216 = vadd.f32 %v214, %v202
    %v217 = vadd.f32 %v215, %v207
    %218 = vst [vmem:[#allocation7] sm:$0xff] %v216
    %219 = vst [vmem:[#allocation7 + $0x8] sm:$0xff] %v217
    // Predicated region
    $region30: #{tpu_custom_call.1} parent=1 // pred_check
      _
    $region31: #{tpu_custom_call.1} parent=1 // pred_check_branch
      %221 = sbr.rel (0) target = $region33
    $region32: #{tpu_custom_call.1} parent=1 // pred_region
      %s223 = ssub.s32 256, 256
      %224 = vsyncadd [#allocation4], %s223
      %s225 = sshll.u32 [#allocation7], 4
      %s226 = int_to_ptr.vmem [resolvable:$true] %s225
      %231 = dma.vmem_to_hbm [thread:$0]  %s226, 256, %s5, [#allocation4], 128, 128, 8
    $region33: #{tpu_custom_call.1} parent=1 // pred_fallthru
      _
    // Predicated region
    $region34: #{tpu_custom_call.1} parent=1 // pred_check
      _
    $region35: #{tpu_custom_call.1} parent=1 // pred_check_branch
      %233 = sbr.rel (0) target = $region37
    $region36: #{tpu_custom_call.1} parent=1 // pred_region
      %234 = dma.done [#allocation4], 256
    $region37: #{tpu_custom_call.1} parent=1 // pred_fallthru
      _
    %235 = vsyncpa [#allocation3], 1
    %236 = vsyncpa [#allocation6], 1
    %237 = vsyncpa [#allocation4], 1

</llo_original>
